<compile_context>
chip_gen: v6e
topology: v6e:2x2x1
jax: 0.10.0
libtpu: 0.0.40
codegen_flags: <defaults>
</compile_context>

<pallas_src>
import functools

import jax
import jax.numpy as jnp
from jax.experimental import pallas as pl
from jax.experimental.pallas import tpu as pltpu


def transition_kernel(x_ref, sb_ref, w2_ref, o_ref, *, cin, use_bf16=False):
    # x_ref:  (1, THp, 2, Wp, 2*Cin)  one strip of output rows (2 input rows each)
    # sb_ref: (2, 2*Cin)              row 0 = folded BN scale (x2), row 1 = bias (x2)
    # w2_ref: (2*Cin, Cout)           [w; w] * 0.25   (pool factor folded in)
    # o_ref:  (1, THp, Wp, Cout)
    x = x_ref[0]                       # (THp, 2, Wp, 2*Cin)
    scale2 = sb_ref[0]                 # (2*Cin,)
    bias2 = sb_ref[1]                  # (2*Cin,)

    # BatchNorm (inference, folded) + ReLU -- elementwise on the VPU.
    y = jnp.maximum(x * scale2 + bias2, 0.0)         # (THp, 2, Wp, 2*Cin)

    # H-pool: the two input rows feeding one output row sit on a leading dim
    # -> one pairwise VPU add, no reduce op, no minor-dim relayout.
    yh = y[:, 0] + y[:, 1]                            # (THp, Wp, 2*Cin)

    thp, wp, cin2 = yh.shape
    cout = w2_ref.shape[1]
    w2 = w2_ref[...]                                  # (2*Cin, Cout)

    if cin <= 32:
        # Tiny channel count: an MXU matmul with K <= 64 runs at a few percent
        # utilization; contract directly over the merged (even|odd column)
        # channel axis with an unrolled VPU multiply-add chain instead.
        acc = yh[..., 0:1] * w2[0:1, :]               # (THp, Wp, Cout)
        for k in range(1, cin2):
            acc = acc + yh[..., k:k + 1] * w2[k:k + 1, :]
        out = acc
    else:
        # Real DenseNet sizes: finish the W-pool with one lane add (offset Cin
        # is a multiple of 128 there -> aligned), then a per-pixel 1x1-conv
        # matmul on the MXU with K = Cin (not 2*Cin).
        pooled = yh[..., :cin] + yh[..., cin:]        # (THp, Wp, Cin)
        lhs = pooled.reshape(thp * wp, cin)
        rhs = w2[:cin, :]
        if use_bf16:
            lhs = lhs.astype(jnp.bfloat16)
            rhs = rhs.astype(jnp.bfloat16)
        out = jnp.dot(lhs, rhs, preferred_element_type=jnp.float32)
        out = out.reshape(thp, wp, cout)

    o_ref[0] = out.astype(o_ref.dtype)


def _choose_strip_rows(hp, w, cin, bytes_budget=4 * 1024 * 1024):
    """Divisor of Hp (= H//2): biggest output-row strip under a VMEM budget,
    preferring >= 2 strips so the pipeliner has work to overlap and megacore
    can shard the axis even when N is small."""
    cands = [t for t in range(1, hp + 1) if hp % t == 0]
    fitting = [t for t in cands if t * 2 * w * cin * 4 <= bytes_budget] or cands[:1]
    multi = [t for t in fitting if hp // t >= 2]
    return max(multi) if multi else max(fitting)


def transition_forward(x_nhwc, gamma, beta, running_mean, running_var, conv_w,
                       eps=1e-5, use_bf16_matmul=False):
    """x_nhwc: (N, H, W, Cin) float32.  conv_w: (Cin, Cout).
    Returns (N, H//2, W//2, Cout)."""
    N, H, W, Cin = x_nhwc.shape
    Cout = conv_w.shape[1]
    assert H % 2 == 0 and W % 2 == 0
    Hp, Wp = H // 2, W // 2

    # Fold BN running stats into per-channel scale/bias; duplicate so they
    # match the merged (even-col | odd-col) channel axis of the reshaped input.
    scale = gamma / jnp.sqrt(running_var + eps)               # (Cin,)
    bias = beta - running_mean * scale                        # (Cin,)
    sb = jnp.stack([jnp.concatenate([scale, scale]),
                    jnp.concatenate([bias, bias])]).astype(jnp.float32)   # (2, 2*Cin)

    # Fold the average-pool's 1/4 into the conv weight and duplicate it along
    # the contraction axis for the merged layout.
    w2 = (jnp.concatenate([conv_w, conv_w], axis=0) * 0.25).astype(jnp.float32)  # (2*Cin, Cout)

    # Free, contiguity-preserving reshape: (N,H,W,C) -> (N,Hp,2,Wp,2C); the
    # trailing axis is [channels of even column | channels of odd column].
    xr = x_nhwc.reshape(N, Hp, 2, Wp, 2 * Cin)

    THp = _choose_strip_rows(Hp, W, Cin)
    grid = (N, Hp // THp)

    kernel = functools.partial(transition_kernel, cin=Cin, use_bf16=use_bf16_matmul)

    return pl.pallas_call(
        kernel,
        out_shape=jax.ShapeDtypeStruct((N, Hp, Wp, Cout), x_nhwc.dtype),
        grid_spec=pltpu.PrefetchScalarGridSpec(
            num_scalar_prefetch=0,
            grid=grid,
            in_specs=[
                pl.BlockSpec((1, THp, 2, Wp, 2 * Cin), lambda n, h: (n, h, 0, 0, 0)),
                pl.BlockSpec((2, 2 * Cin), lambda n, h: (0, 0)),
                pl.BlockSpec((2 * Cin, Cout), lambda n, h: (0, 0)),
            ],
            out_specs=pl.BlockSpec((1, THp, Wp, Cout), lambda n, h: (n, h, 0, 0)),
        ),
        compiler_params=pltpu.CompilerParams(
            dimension_semantics=("parallel", "parallel"),
        ),
    )(xr, sb, w2)


def transition_reference(x_nhwc, gamma, beta, running_mean, running_var, conv_w, eps=1e-5):
    """Pure-JAX reference (NHWC), matching PyTorch eval-mode semantics."""
    scale = gamma / jnp.sqrt(running_var + eps)
    bias = beta - running_mean * scale
    y = jnp.maximum(x_nhwc * scale + bias, 0.0)
    y = jnp.einsum("nhwc,cd->nhwd", y, conv_w)
    N, H, W, Cout = y.shape
    y = y.reshape(N, H // 2, 2, W // 2, 2, Cout).mean(axis=(2, 4))
    return y


if __name__ == "__main__":
    key = jax.random.PRNGKey(0)
    k_x, k_g, k_b, k_m, k_v, k_w = jax.random.split(key, 6)

    N, Cin, H, W = 2, 4, 16, 16
    Cout = 8

    # NHWC input (equivalent to a PyTorch NCHW tensor of shape (2, 4, 16, 16)).
    x = jax.random.normal(k_x, (N, H, W, Cin), dtype=jnp.float32)

    # Deterministic synthetic parameters (shapes from the module __init__).
    gamma = 1.0 + 0.1 * jax.random.normal(k_g, (Cin,), dtype=jnp.float32)
    beta = 0.1 * jax.random.normal(k_b, (Cin,), dtype=jnp.float32)
    running_mean = 0.1 * jax.random.normal(k_m, (Cin,), dtype=jnp.float32)
    running_var = jnp.abs(1.0 + 0.1 * jax.random.normal(k_v, (Cin,), dtype=jnp.float32))
    conv_w = jax.random.normal(k_w, (Cin, Cout), dtype=jnp.float32) * 0.1

    out = transition_forward(x, gamma, beta, running_mean, running_var, conv_w)
    out = jax.block_until_ready(out)

    ref = transition_reference(x, gamma, beta, running_mean, running_var, conv_w)
    assert out.shape == (N, H // 2, W // 2, Cout), out.shape
    # Pool-before-conv reassociates the sum: allow a slightly looser (still tight) tolerance.
    assert jnp.allclose(out, ref, atol=1e-4, rtol=1e-4), float(jnp.max(jnp.abs(out - ref)))

    print("KERNEL_OK")
</pallas_src>

<mosaic_0001>
module attributes {stable_mosaic.version = 11 : i64} {
  func.func @transition_kernel(%arg0: i32, %arg1: i32, %arg2: memref<1x4x2x8x8xf32, #tpu.memory_space<vmem>>, %arg3: memref<2x8xf32, #tpu.memory_space<vmem>>, %arg4: memref<8x8xf32, #tpu.memory_space<vmem>>, %arg5: memref<1x4x8x8xf32, #tpu.memory_space<vmem>>) attributes {dimension_semantics = [#tpu.dimension_semantics<parallel>, #tpu.dimension_semantics<parallel>], iteration_bounds = array<i64: 2, 2>, scalar_prefetch = 0 : i64, scratch_operands = 0 : i64, tpu.core_type = #tpu.core_type<tc>, window_params = [{transform_indices = @transform_0, window_bounds = array<i64: 1, 4, 2, 8, 8>}, {pipeline_mode = #tpu.pipeline_mode<synchronous>, transform_indices = @transform_1, window_bounds = array<i64: 2, 8>}, {pipeline_mode = #tpu.pipeline_mode<synchronous>, transform_indices = @transform_2, window_bounds = array<i64: 8, 8>}, {transform_indices = @transform_3, window_bounds = array<i64: 1, 4, 8, 8>}]} {
    %c0 = arith.constant 0 : index
    %c0_0 = arith.constant 0 : index
    %c0_1 = arith.constant 0 : index
    %c0_2 = arith.constant 0 : index
    %c0_3 = arith.constant 0 : index
    %0 = vector.load %arg2[%c0, %c0_0, %c0_1, %c0_2, %c0_3] : memref<1x4x2x8x8xf32, #tpu.memory_space<vmem>>, vector<1x4x2x8x8xf32>
    %1 = vector.shape_cast %0 : vector<1x4x2x8x8xf32> to vector<4x2x8x8xf32>
    %c0_4 = arith.constant 0 : index
    %c0_5 = arith.constant 0 : index
    %2 = vector.load %arg3[%c0_4, %c0_5] : memref<2x8xf32, #tpu.memory_space<vmem>>, vector<1x8xf32>
    %3 = vector.shape_cast %2 : vector<1x8xf32> to vector<8xf32>
    %c1 = arith.constant 1 : index
    %c0_6 = arith.constant 0 : index
    %4 = vector.load %arg3[%c1, %c0_6] : memref<2x8xf32, #tpu.memory_space<vmem>>, vector<1x8xf32>
    %5 = vector.shape_cast %4 : vector<1x8xf32> to vector<8xf32>
    %6 = vector.shape_cast %3 : vector<8xf32> to vector<1x1x1x8xf32>
    %7 = vector.broadcast %6 : vector<1x1x1x8xf32> to vector<4x2x8x8xf32>
    %8 = arith.mulf %1, %7 : vector<4x2x8x8xf32>
    %9 = vector.shape_cast %5 : vector<8xf32> to vector<1x1x1x8xf32>
    %10 = vector.broadcast %9 : vector<1x1x1x8xf32> to vector<4x2x8x8xf32>
    %11 = arith.addf %8, %10 : vector<4x2x8x8xf32>
    %cst = arith.constant 0.000000e+00 : f32
    %12 = vector.broadcast %cst : f32 to vector<4x2x8x8xf32>
    %13 = arith.maximumf %11, %12 : vector<4x2x8x8xf32>
    %14 = vector.extract_strided_slice %13 {offsets = [0, 0, 0, 0], sizes = [4, 1, 8, 8], strides = [1, 1, 1, 1]} : vector<4x2x8x8xf32> to vector<4x1x8x8xf32>
    %15 = vector.shape_cast %14 : vector<4x1x8x8xf32> to vector<4x8x8xf32>
    %16 = vector.extract_strided_slice %13 {offsets = [0, 1, 0, 0], sizes = [4, 1, 8, 8], strides = [1, 1, 1, 1]} : vector<4x2x8x8xf32> to vector<4x1x8x8xf32>
    %17 = vector.shape_cast %16 : vector<4x1x8x8xf32> to vector<4x8x8xf32>
    %18 = arith.addf %15, %17 : vector<4x8x8xf32>
    %c0_7 = arith.constant 0 : index
    %c0_8 = arith.constant 0 : index
    %19 = vector.load %arg4[%c0_7, %c0_8] : memref<8x8xf32, #tpu.memory_space<vmem>>, vector<8x8xf32>
    %20 = vector.extract_strided_slice %18 {offsets = [0, 0, 0], sizes = [4, 8, 1], strides = [1, 1, 1]} : vector<4x8x8xf32> to vector<4x8x1xf32>
    %21 = vector.extract_strided_slice %19 {offsets = [0, 0], sizes = [1, 8], strides = [1, 1]} : vector<8x8xf32> to vector<1x8xf32>
    %22 = vector.shape_cast %21 : vector<1x8xf32> to vector<1x1x8xf32>
    %23 = vector.broadcast %20 : vector<4x8x1xf32> to vector<4x8x8xf32>
    %24 = vector.broadcast %22 : vector<1x1x8xf32> to vector<4x8x8xf32>
    %25 = arith.mulf %23, %24 : vector<4x8x8xf32>
    %26 = vector.extract_strided_slice %18 {offsets = [0, 0, 1], sizes = [4, 8, 1], strides = [1, 1, 1]} : vector<4x8x8xf32> to vector<4x8x1xf32>
    %27 = vector.extract_strided_slice %19 {offsets = [1, 0], sizes = [1, 8], strides = [1, 1]} : vector<8x8xf32> to vector<1x8xf32>
    %28 = vector.shape_cast %27 : vector<1x8xf32> to vector<1x1x8xf32>
    %29 = vector.broadcast %26 : vector<4x8x1xf32> to vector<4x8x8xf32>
    %30 = vector.broadcast %28 : vector<1x1x8xf32> to vector<4x8x8xf32>
    %31 = arith.mulf %29, %30 : vector<4x8x8xf32>
    %32 = arith.addf %25, %31 : vector<4x8x8xf32>
    %33 = vector.extract_strided_slice %18 {offsets = [0, 0, 2], sizes = [4, 8, 1], strides = [1, 1, 1]} : vector<4x8x8xf32> to vector<4x8x1xf32>
    %34 = vector.extract_strided_slice %19 {offsets = [2, 0], sizes = [1, 8], strides = [1, 1]} : vector<8x8xf32> to vector<1x8xf32>
    %35 = vector.shape_cast %34 : vector<1x8xf32> to vector<1x1x8xf32>
    %36 = vector.broadcast %33 : vector<4x8x1xf32> to vector<4x8x8xf32>
    %37 = vector.broadcast %35 : vector<1x1x8xf32> to vector<4x8x8xf32>
    %38 = arith.mulf %36, %37 : vector<4x8x8xf32>
    %39 = arith.addf %32, %38 : vector<4x8x8xf32>
    %40 = vector.extract_strided_slice %18 {offsets = [0, 0, 3], sizes = [4, 8, 1], strides = [1, 1, 1]} : vector<4x8x8xf32> to vector<4x8x1xf32>
    %41 = vector.extract_strided_slice %19 {offsets = [3, 0], sizes = [1, 8], strides = [1, 1]} : vector<8x8xf32> to vector<1x8xf32>
    %42 = vector.shape_cast %41 : vector<1x8xf32> to vector<1x1x8xf32>
    %43 = vector.broadcast %40 : vector<4x8x1xf32> to vector<4x8x8xf32>
    %44 = vector.broadcast %42 : vector<1x1x8xf32> to vector<4x8x8xf32>
    %45 = arith.mulf %43, %44 : vector<4x8x8xf32>
    %46 = arith.addf %39, %45 : vector<4x8x8xf32>
    %47 = vector.extract_strided_slice %18 {offsets = [0, 0, 4], sizes = [4, 8, 1], strides = [1, 1, 1]} : vector<4x8x8xf32> to vector<4x8x1xf32>
    %48 = vector.extract_strided_slice %19 {offsets = [4, 0], sizes = [1, 8], strides = [1, 1]} : vector<8x8xf32> to vector<1x8xf32>
    %49 = vector.shape_cast %48 : vector<1x8xf32> to vector<1x1x8xf32>
    %50 = vector.broadcast %47 : vector<4x8x1xf32> to vector<4x8x8xf32>
    %51 = vector.broadcast %49 : vector<1x1x8xf32> to vector<4x8x8xf32>
    %52 = arith.mulf %50, %51 : vector<4x8x8xf32>
    %53 = arith.addf %46, %52 : vector<4x8x8xf32>
    %54 = vector.extract_strided_slice %18 {offsets = [0, 0, 5], sizes = [4, 8, 1], strides = [1, 1, 1]} : vector<4x8x8xf32> to vector<4x8x1xf32>
    %55 = vector.extract_strided_slice %19 {offsets = [5, 0], sizes = [1, 8], strides = [1, 1]} : vector<8x8xf32> to vector<1x8xf32>
    %56 = vector.shape_cast %55 : vector<1x8xf32> to vector<1x1x8xf32>
    %57 = vector.broadcast %54 : vector<4x8x1xf32> to vector<4x8x8xf32>
    %58 = vector.broadcast %56 : vector<1x1x8xf32> to vector<4x8x8xf32>
    %59 = arith.mulf %57, %58 : vector<4x8x8xf32>
    %60 = arith.addf %53, %59 : vector<4x8x8xf32>
    %61 = vector.extract_strided_slice %18 {offsets = [0, 0, 6], sizes = [4, 8, 1], strides = [1, 1, 1]} : vector<4x8x8xf32> to vector<4x8x1xf32>
    %62 = vector.extract_strided_slice %19 {offsets = [6, 0], sizes = [1, 8], strides = [1, 1]} : vector<8x8xf32> to vector<1x8xf32>
    %63 = vector.shape_cast %62 : vector<1x8xf32> to vector<1x1x8xf32>
    %64 = vector.broadcast %61 : vector<4x8x1xf32> to vector<4x8x8xf32>
    %65 = vector.broadcast %63 : vector<1x1x8xf32> to vector<4x8x8xf32>
    %66 = arith.mulf %64, %65 : vector<4x8x8xf32>
    %67 = arith.addf %60, %66 : vector<4x8x8xf32>
    %68 = vector.extract_strided_slice %18 {offsets = [0, 0, 7], sizes = [4, 8, 1], strides = [1, 1, 1]} : vector<4x8x8xf32> to vector<4x8x1xf32>
    %69 = vector.extract_strided_slice %19 {offsets = [7, 0], sizes = [1, 8], strides = [1, 1]} : vector<8x8xf32> to vector<1x8xf32>
    %70 = vector.shape_cast %69 : vector<1x8xf32> to vector<1x1x8xf32>
    %71 = vector.broadcast %68 : vector<4x8x1xf32> to vector<4x8x8xf32>
    %72 = vector.broadcast %70 : vector<1x1x8xf32> to vector<4x8x8xf32>
    %73 = arith.mulf %71, %72 : vector<4x8x8xf32>
    %74 = arith.addf %67, %73 : vector<4x8x8xf32>
    %c0_9 = arith.constant 0 : index
    %c0_10 = arith.constant 0 : index
    %c0_11 = arith.constant 0 : index
    %c0_12 = arith.constant 0 : index
    %75 = vector.load %arg5[%c0_9, %c0_10, %c0_11, %c0_12] : memref<1x4x8x8xf32, #tpu.memory_space<vmem>>, vector<1x4x8x8xf32>
    %76 = vector.shape_cast %75 : vector<1x4x8x8xf32> to vector<4x8x8xf32>
    %77 = vector.shape_cast %74 : vector<4x8x8xf32> to vector<1x4x8x8xf32>
    tpu.vector_store %arg5[%c0_9, %c0_10, %c0_11, %c0_12], %77 {strides = array<i32>} : memref<1x4x8x8xf32, #tpu.memory_space<vmem>>, vector<1x4x8x8xf32>,
    return
  }
  func.func @transform_0(%arg0: i32, %arg1: i32) -> (i32, i32, i32, i32, i32) {
    %c0_i32 = arith.constant 0 : i32
    %c0_i32_0 = arith.constant 0 : i32
    %c0_i32_1 = arith.constant 0 : i32
    %c0_i32_2 = arith.constant 0 : i32
    return %arg0, %arg1, %c0_i32, %c0_i32_0, %c0_i32_1 : i32, i32, i32, i32, i32
  }
  func.func @transform_1(%arg0: i32, %arg1: i32) -> (i32, i32) {
    %c0_i32 = arith.constant 0 : i32
    %c0_i32_0 = arith.constant 0 : i32
    %c0_i32_1 = arith.constant 0 : i32
    return %c0_i32, %c0_i32_0 : i32, i32
  }
  func.func @transform_2(%arg0: i32, %arg1: i32) -> (i32, i32) {
    %c0_i32 = arith.constant 0 : i32
    %c0_i32_0 = arith.constant 0 : i32
    %c0_i32_1 = arith.constant 0 : i32
    return %c0_i32, %c0_i32_0 : i32, i32
  }
  func.func @transform_3(%arg0: i32, %arg1: i32) -> (i32, i32, i32, i32) {
    %c0_i32 = arith.constant 0 : i32
    %c0_i32_0 = arith.constant 0 : i32
    %c0_i32_1 = arith.constant 0 : i32
    return %arg0, %arg1, %c0_i32, %c0_i32_0 : i32, i32, i32, i32
  }
}

</mosaic_0001>

<llo_original>
// kernel: tpu_custom_call.1
$region0: #{tpu_custom_call.1}
  #allocation0 [shape = 'u32[]', space=smem, size = 0x4, offset = 0x4, fixed_abs, tag = 'smem constant byte address 0x4 - core index']
  #allocation1 [shape = 'u32[144,128]{1,0:T(1,128)}', space=vmem, size = 0x12000, scoped, tag = 'internal scratch']
  %s0 = inlined_call_operand.hbm [shape: f32[2,8,2,8,8], index: 0, kind: input, shape index: {}]
  %s1 = inlined_call_operand.hbm [shape: f32[2,8], index: 1, kind: input, shape index: {}]
  %s2 = inlined_call_operand.hbm [shape: f32[8,8], index: 2, kind: input, shape index: {}]
  %s3 = inlined_call_operand.hbm [shape: f32[2,8,8,8], index: 3, kind: output, shape index: {}]
  %s4 = sld [smem:[#allocation0]]
  $region57: #{tpu_custom_call.1} parent=0
    _
  %s6 = ssub.s32 1, %s4
  %s7 = scalar_select 0, %s6, %s4
  $region1: #{tpu_custom_call.1} parent=0
    #allocation2 [shape = 'u8[65536]{0}', space=vmem, size = 0x10000, scoped, tag = 'input window, operand 0']
    #allocation3 [shape = 's32[2]{0}', space=sflag, size = 0x8, scoped, tag = 'scoped memory for tpu_custom_call.1']
    #allocation4 [shape = 's32[2]{0}', space=sflag, size = 0x8, scoped, tag = 'scoped memory for tpu_custom_call.1']
    #allocation5 [shape = 'u8[1024]{0}', space=vmem, size = 0x400, scoped, tag = 'input window, operand 1, single buffered']
    #allocation6 [shape = 's32[1]{0}', space=sflag, size = 0x4, scoped, tag = 'scoped memory for tpu_custom_call.1']
    #allocation7 [shape = 'u8[4096]{0}', space=vmem, size = 0x1000, scoped, tag = 'input window, operand 2, single buffered']
    #allocation8 [shape = 'u8[32768]{0}', space=vmem, size = 0x8000, scoped, tag = 'output window, operand 0']
    %8 = vsyncpa [#allocation3], 0
    %s9 = scalar_lea.sflag [#allocation3], 1
    %10 = vsyncpa %s9, 0
    %11 = vsyncpa [#allocation6], 0
    %12 = vsyncpa [#allocation4], 0
    %s13 = scalar_lea.sflag [#allocation4], 1
    %14 = vsyncpa %s13, 0
    loop: start=0, step=1, limit=6
    $region2: #{tpu_custom_call.1} parent=1 // loop_pre_header
      _
    $region3: #{tpu_custom_call.1} parent=1 // loop_header
      %s16 = sphi 0, %s20
      %p17 = scmp.ge.s32.totalorder %s16, 6
      %s23 = sphi 0, %s35
      %s24 = sphi 0, %s31
      %s25 = sphi 0, %s23
      %s26 = sphi 0, %s24
      %s27 = sphi 0, %s25
      %s28 = sphi 0, %s26
      %s40 = sphi 0, %s42
      %s43 = sphi 0, %s40
      %s44 = sphi 0, %s43
      %s60 = sphi 0, %s44
      %s64 = sphi 0, %s64
      %s66 = sphi 0, %s64
      %s67 = sphi 0, %s66
      %s81 = sphi 0, %s67
      %s85 = sphi 0, %s85
      %s87 = sphi 0, %s85
      %s88 = sphi 0, %s87
      %s102 = sphi 0, %s88
      %s110 = sphi 0, %s112
      %s113 = sphi 0, %s110
      %s114 = sphi 0, %s113
      %s130 = sphi 0, %s114
    $region4: #{tpu_custom_call.1} parent=1 // loop_header_branch
      %19 = sbr.rel (%p17) target = $region8
    $region5: #{tpu_custom_call.1} parent=1 // loop_body
      %s21 = ssub.s32 %s16, 1
      %s22 = ssub.s32 %s16, 2
      %s29 = sadd.s32 1, %s24
      %p30 = scmp.ge.s32.totalorder %s29, 2
      %s31 = scalar_select %p30, 0, %s29
      %s32 = sadd.s32 1, %s23
      %s33 = scalar_select %p30, %s32, %s23
      %p34 = scmp.ge.s32.totalorder %s33, 2
      %s35 = scalar_select %p34, 0, %s33
      %s36 = ssub.s32 %s23, %s35
      %s37 = ssub.s32 %s24, %s31
      %s38 = sor.u32 %s36, %s37
      %p39 = scmp.eq.s32.totalorder %s38, 0
      %s41 = sadd.s32 %s40, 1
      %s42 = scalar_select %p39, %s40, %s41
      %p45 = pneg %p39
      %p46 = scmp.eq.s32.totalorder %s16, 3
      %p47 = por %p45, %p46
      %p48 = scmp.ne.s32.totalorder %s40, %s43
      %p49 = scmp.eq.s32.totalorder %s16, 0
      %p50 = por %p48, %p49
      %p51 = scmp.ne.s32.totalorder %s40, %s43
      %p52 = scmp.eq.s32.totalorder %s21, 3
      %p53 = por %p51, %p52
      %p54 = scmp.ne.s32.totalorder %s43, %s44
      %p55 = scmp.eq.s32.totalorder %s21, 0
      %p56 = por %p54, %p55
      %p57 = scmp.ne.s32.totalorder %s43, %s44
      %p58 = scmp.eq.s32.totalorder %s22, 3
      %p59 = por %p57, %p58
      %p61 = scmp.ne.s32.totalorder %s44, %s60
      %p62 = scmp.eq.s32.totalorder %s22, 0
      %p63 = por %p61, %p62
      %s65 = sadd.s32 %s64, 1
      %p68 = scmp.eq.s32.totalorder %s16, 3
      %p69 = scmp.ne.s32.totalorder %s64, %s66
      %p70 = scmp.eq.s32.totalorder %s16, 0
      %p71 = por %p69, %p70
      %p72 = scmp.ne.s32.totalorder %s64, %s66
      %p73 = scmp.eq.s32.totalorder %s21, 3
      %p74 = por %p72, %p73
      %p75 = scmp.ne.s32.totalorder %s66, %s67
      %p76 = scmp.eq.s32.totalorder %s21, 0
      %p77 = por %p75, %p76
      %p78 = scmp.ne.s32.totalorder %s66, %s67
      %p79 = scmp.eq.s32.totalorder %s22, 3
      %p80 = por %p78, %p79
      %p82 = scmp.ne.s32.totalorder %s67, %s81
      %p83 = scmp.eq.s32.totalorder %s22, 0
      %p84 = por %p82, %p83
      %s86 = sadd.s32 %s85, 1
      %p89 = scmp.eq.s32.totalorder %s16, 3
      %p90 = scmp.ne.s32.totalorder %s85, %s87
      %p91 = scmp.eq.s32.totalorder %s16, 0
      %p92 = por %p90, %p91
      %p93 = scmp.ne.s32.totalorder %s85, %s87
      %p94 = scmp.eq.s32.totalorder %s21, 3
      %p95 = por %p93, %p94
      %p96 = scmp.ne.s32.totalorder %s87, %s88
      %p97 = scmp.eq.s32.totalorder %s21, 0
      %p98 = por %p96, %p97
      %p99 = scmp.ne.s32.totalorder %s87, %s88
      %p100 = scmp.eq.s32.totalorder %s22, 3
      %p101 = por %p99, %p100
      %p103 = scmp.ne.s32.totalorder %s88, %s102
      %p104 = scmp.eq.s32.totalorder %s22, 0
      %p105 = por %p103, %p104
      %s106 = ssub.s32 %s23, %s35
      %s107 = ssub.s32 %s24, %s31
      %s108 = sor.u32 %s106, %s107
      %p109 = scmp.eq.s32.totalorder %s108, 0
      %s111 = sadd.s32 %s110, 1
      %s112 = scalar_select %p109, %s110, %s111
      %p115 = pneg %p109
      %p116 = scmp.eq.s32.totalorder %s16, 3
      %p117 = por %p115, %p116
      %p118 = scmp.ne.s32.totalorder %s110, %s113
      %p119 = scmp.eq.s32.totalorder %s16, 0
      %p120 = por %p118, %p119
      %p121 = scmp.ne.s32.totalorder %s110, %s113
      %p122 = scmp.eq.s32.totalorder %s21, 3
      %p123 = por %p121, %p122
      %p124 = scmp.ne.s32.totalorder %s113, %s114
      %p125 = scmp.eq.s32.totalorder %s21, 0
      %p126 = por %p124, %p125
      %p127 = scmp.ne.s32.totalorder %s113, %s114
      %p128 = scmp.eq.s32.totalorder %s22, 3
      %p129 = por %p127, %p128
      %p131 = scmp.ne.s32.totalorder %s114, %s130
      %p132 = scmp.eq.s32.totalorder %s22, 0
      %p133 = por %p131, %p132
      %p134 = scmp.le.s32.totalorder 1, %s16
      %p135 = scmp.lt.s32.totalorder %s16, 5
      %p136 = pnand %p134, %p135
      %p137 = pneg %p136
      // Predicated region
      $region9: #{tpu_custom_call.1} parent=5 // pred_check
        _
      $region10: #{tpu_custom_call.1} parent=5 // pred_check_branch
        %139 = sbr.rel (%p136) target = $region12
      $region11: #{tpu_custom_call.1} parent=5 // pred_region
        %s140 = ssub.s32 %s16, 1
        // Predicated region
        $region13: #{tpu_custom_call.1} parent=11 // pred_check
          %p141 = pneg %p77
        $region14: #{tpu_custom_call.1} parent=11 // pred_check_branch
          %143 = sbr.rel (%p141) target = $region16
        $region15: #{tpu_custom_call.1} parent=11 // pred_region
          %s145 = ssub.s32 32, 32
          %146 = vsyncadd [#allocation6], %s145
          %s148 = sshll.u32 [#allocation5], 4
          %s149 = int_to_ptr.vmem [resolvable:$true] %s148
          %151 = dma.hbm_to_vmem [thread:$0]  %s1, 32, %s149, [#allocation6]
        $region16: #{tpu_custom_call.1} parent=11 // pred_fallthru
          _
        // Predicated region
        $region17: #{tpu_custom_call.1} parent=11 // pred_check
          %p152 = pneg %p98
        $region18: #{tpu_custom_call.1} parent=11 // pred_check_branch
          %154 = sbr.rel (%p152) target = $region20
        $region19: #{tpu_custom_call.1} parent=11 // pred_region
          %s156 = ssub.s32 128, 128
          %157 = vsyncadd [#allocation6], %s156
          %s159 = sshll.u32 [#allocation7], 4
          %s160 = int_to_ptr.vmem [resolvable:$true] %s159
          %162 = dma.hbm_to_vmem [thread:$0]  %s2, 128, %s160, [#allocation6]
        $region20: #{tpu_custom_call.1} parent=11 // pred_fallthru
          _
      $region12: #{tpu_custom_call.1} parent=5 // pred_fallthru
        _
      %p163 = scmp.lt.s32.totalorder %s16, 4
      // Predicated region
      $region21: #{tpu_custom_call.1} parent=5 // pred_check
        %p164 = pneg %p163
      $region22: #{tpu_custom_call.1} parent=5 // pred_check_branch
        %166 = sbr.rel (%p164) target = $region24
      $region23: #{tpu_custom_call.1} parent=5 // pred_region
        // Predicated region
        $region25: #{tpu_custom_call.1} parent=23 // pred_check
          %p167 = pneg %p50
        $region26: #{tpu_custom_call.1} parent=23 // pred_check_branch
          %169 = sbr.rel (%p167) target = $region28
        $region27: #{tpu_custom_call.1} parent=23 // pred_region
          %s170 = sand.u32 %s40, 1
          %s171 = scalar_lea.sflag [#allocation3], %s170
          %s172 = sand.u32 %s40, 1
          %s173 = smul.addr %s172, 64
          %s174 = scalar_lea.vmem [#allocation2], %s173
          %s175 = smul.u32 4, %s24
          %s177 = ssub.s32 1024, 1024
          %178 = vsyncadd %s171, %s177
          %s179 = smul.addr %s175, 2
          %s180 = smul.addr %s23, 16
          %s181 = sadd.s32 %s179, %s180
          %s182 = smul.addr %s181, 128
          %s183 = scalar_lea.hbm %s0, %s182
          %s184 = sshll.u32 %s174, 4
          %s185 = int_to_ptr.vmem [resolvable:$true] %s184
          %190 = dma.hbm_to_vmem [thread:$0]  %s183, 1024, %s185, %s171, 128, 128, 8
        $region28: #{tpu_custom_call.1} parent=23 // pred_fallthru
          _
      $region24: #{tpu_custom_call.1} parent=5 // pred_fallthru
        _
      %p191 = scmp.le.s32.totalorder 1, %s16
      %p192 = scmp.lt.s32.totalorder %s16, 5
      %p193 = pnand %p191, %p192
      %p194 = pneg %p193
      // Predicated region
      $region29: #{tpu_custom_call.1} parent=5 // pred_check
        _
      $region30: #{tpu_custom_call.1} parent=5 // pred_check_branch
        %196 = sbr.rel (%p193) target = $region32
      $region31: #{tpu_custom_call.1} parent=5 // pred_region
        %s197 = ssub.s32 %s16, 1
        %s198 = sand.u32 %s43, 1
        %s199 = scalar_lea.sflag [#allocation3], %s198
        %s200 = sand.u32 %s43, 1
        %s201 = smul.addr %s200, 64
        %s202 = scalar_lea.vmem [#allocation2], %s201
        // Predicated region
        $region33: #{tpu_custom_call.1} parent=31 // pred_check
          %p203 = pneg %p56
        $region34: #{tpu_custom_call.1} parent=31 // pred_check_branch
          %205 = sbr.rel (%p203) target = $region36
        $region35: #{tpu_custom_call.1} parent=31 // pred_region
          %206 = dma.done %s199, 1024
        $region36: #{tpu_custom_call.1} parent=31 // pred_fallthru
          _
        // Predicated region
        $region37: #{tpu_custom_call.1} parent=31 // pred_check
          %p207 = pneg %p77
        $region38: #{tpu_custom_call.1} parent=31 // pred_check_branch
          %209 = sbr.rel (%p207) target = $region40
        $region39: #{tpu_custom_call.1} parent=31 // pred_region
          %210 = dma.done [#allocation6], 32
        $region40: #{tpu_custom_call.1} parent=31 // pred_fallthru
          _
        // Predicated region
        $region41: #{tpu_custom_call.1} parent=31 // pred_check
          %p211 = pneg %p98
        $region42: #{tpu_custom_call.1} parent=31 // pred_check_branch
          %213 = sbr.rel (%p211) target = $region44
        $region43: #{tpu_custom_call.1} parent=31 // pred_region
          %214 = dma.done [#allocation6], 128
        $region44: #{tpu_custom_call.1} parent=31 // pred_fallthru
          _
        %s215 = sand.u32 %s43, 1
        %s216 = scalar_lea.sflag [#allocation3], %s215
        %s217 = sand.u32 %s43, 1
        %s218 = smul.addr %s217, 64
        %s219 = scalar_lea.vmem [#allocation2], %s218
        %p220 = pneg %p56
        %p221 = pneg %p53
        %p222 = pneg %p77
        %p223 = pneg %p74
        %p224 = pneg %p98
        %p225 = pneg %p95
        %p226 = pneg %p126
        %p227 = pneg %p123
        %s228 = sand.u32 %s113, 1
        %s229 = scalar_lea.sflag [#allocation4], %s228
        %s230 = sand.u32 %s113, 1
        %s231 = smul.addr %s230, 32
        %s232 = scalar_lea.vmem [#allocation8], %s231
        %s233 = smul.u32 4, %s26
        %s234 = smul.u32 4, %s26
        %v235 = vld [vmem:[%s202] sm:$0xff]
        %v236 = vld [vmem:[%s202 + $0x8] sm:$0xff]
        %v237 = vld [vmem:[%s202 + $0x10] sm:$0xff]
        %v238 = vld [vmem:[%s202 + $0x18] sm:$0xff]
        %v239 = vld [vmem:[%s202 + $0x20] sm:$0xff]
        %v240 = vld [vmem:[%s202 + $0x28] sm:$0xff]
        %v241 = vld [vmem:[%s202 + $0x30] sm:$0xff]
        %v242 = vld [vmem:[%s202 + $0x38] sm:$0xff]
        %v243 = vld [vmem:[#allocation5] sm:$0x1]
        %v244 = vld [vmem:[#allocation5 + $0x1] sm:$0x1]
        %v245 = vlaneseq
        %v246 = vshrl.u32 %v245, 7
        %v247 = vsub.s32 0, %v246
        %v248 = vrot.slane %v243, %v247
        %v249 = vmul.f32 %v235, %v248
        %v250 = vmul.f32 %v236, %v248
        %v251 = vmul.f32 %v237, %v248
        %v252 = vmul.f32 %v238, %v248
        %v253 = vmul.f32 %v239, %v248
        %v254 = vmul.f32 %v240, %v248
        %v255 = vmul.f32 %v241, %v248
        %v256 = vmul.f32 %v242, %v248
        %v257 = vlaneseq
        %v258 = vshrl.u32 %v257, 7
        %v259 = vsub.s32 0, %v258
        %v260 = vrot.slane %v244, %v259
        %v261 = vadd.f32 %v249, %v260
        %v262 = vadd.f32 %v250, %v260
        %v263 = vadd.f32 %v251, %v260
        %v264 = vadd.f32 %v252, %v260
        %v265 = vadd.f32 %v253, %v260
        %v266 = vadd.f32 %v254, %v260
        %v267 = vadd.f32 %v255, %v260
        %v268 = vadd.f32 %v256, %v260
        %v269 = vmax.f32 %v261, 0.0
        %v270 = vmax.f32 %v262, 0.0
        %v271 = vmax.f32 %v263, 0.0
        %v272 = vmax.f32 %v264, 0.0
        %v273 = vmax.f32 %v265, 0.0
        %v274 = vmax.f32 %v266, 0.0
        %v275 = vmax.f32 %v267, 0.0
        %v276 = vmax.f32 %v268, 0.0
        %v277 = vadd.f32 %v269, %v270
        %v278 = vadd.f32 %v271, %v272
        %v279 = vadd.f32 %v273, %v274
        %v280 = vadd.f32 %v275, %v276
        %v281 = vld [vmem:[#allocation7] sm:$0xff]
        %283 = vset.pattern.permute.xlu0 0
        %284 = vperm.xlu0 %283, %v277
        %v285 = vpop.permute.xlu0 %284
        %288 = vset.pattern.permute.xlu0 0
        %289 = vperm.xlu0 %288, %v278
        %v290 = vpop.permute.xlu0 %289
        %293 = vset.pattern.permute.xlu0 0
        %294 = vperm.xlu0 %293, %v279
        %v295 = vpop.permute.xlu0 %294
        %298 = vset.pattern.permute.xlu0 0
        %299 = vperm.xlu0 %298, %v280
        %v300 = vpop.permute.xlu0 %299
        %v302 = vlaneseq
        %v303 = vshrl.u32 %v302, 7
        %v304 = vsub.s32 0, %v303
        %v305 = vrot.slane %v281, %v304
        %v306 = vmul.f32 %v285, %v305
        %v307 = vmul.f32 %v290, %v305
        %v308 = vmul.f32 %v295, %v305
        %v309 = vmul.f32 %v300, %v305
        %310 = vset.pattern.permute.xlu0 1
        %311 = vperm.xlu0 %310, %v277
        %v312 = vpop.permute.xlu0 %311
        %314 = vset.pattern.permute.xlu0 1
        %315 = vperm.xlu0 %314, %v278
        %v316 = vpop.permute.xlu0 %315
        %318 = vset.pattern.permute.xlu0 1
        %319 = vperm.xlu0 %318, %v279
        %v320 = vpop.permute.xlu0 %319
        %322 = vset.pattern.permute.xlu0 1
        %323 = vperm.xlu0 %322, %v280
        %v324 = vpop.permute.xlu0 %323
        %v326 = vlaneseq
        %v327 = vshrl.u32 %v326, 7
        %v328 = vsub.s32 1, %v327
        %v329 = vrot.slane %v281, %v328
        %v330 = vmul.f32 %v312, %v329
        %v331 = vmul.f32 %v316, %v329
        %v332 = vmul.f32 %v320, %v329
        %v333 = vmul.f32 %v324, %v329
        %v334 = vadd.f32 %v306, %v330
        %v335 = vadd.f32 %v307, %v331
        %v336 = vadd.f32 %v308, %v332
        %v337 = vadd.f32 %v309, %v333
        %338 = vset.pattern.permute.xlu0 2
        %339 = vperm.xlu0 %338, %v277
        %v340 = vpop.permute.xlu0 %339
        %342 = vset.pattern.permute.xlu0 2
        %343 = vperm.xlu0 %342, %v278
        %v344 = vpop.permute.xlu0 %343
        %346 = vset.pattern.permute.xlu0 2
        %347 = vperm.xlu0 %346, %v279
        %v348 = vpop.permute.xlu0 %347
        %350 = vset.pattern.permute.xlu0 2
        %351 = vperm.xlu0 %350, %v280
        %v352 = vpop.permute.xlu0 %351
        %v354 = vlaneseq
        %v355 = vshrl.u32 %v354, 7
        %v356 = vsub.s32 2, %v355
        %v357 = vrot.slane %v281, %v356
        %v358 = vmul.f32 %v340, %v357
        %v359 = vmul.f32 %v344, %v357
        %v360 = vmul.f32 %v348, %v357
        %v361 = vmul.f32 %v352, %v357
        %v362 = vadd.f32 %v334, %v358
        %v363 = vadd.f32 %v335, %v359
        %v364 = vadd.f32 %v336, %v360
        %v365 = vadd.f32 %v337, %v361
        %366 = vset.pattern.permute.xlu0 3
        %367 = vperm.xlu0 %366, %v277
        %v368 = vpop.permute.xlu0 %367
        %370 = vset.pattern.permute.xlu0 3
        %371 = vperm.xlu0 %370, %v278
        %v372 = vpop.permute.xlu0 %371
        %374 = vset.pattern.permute.xlu0 3
        %375 = vperm.xlu0 %374, %v279
        %v376 = vpop.permute.xlu0 %375
        %378 = vset.pattern.permute.xlu0 3
        %379 = vperm.xlu0 %378, %v280
        %v380 = vpop.permute.xlu0 %379
        %v382 = vlaneseq
        %v383 = vshrl.u32 %v382, 7
        %v384 = vsub.s32 3, %v383
        %v385 = vrot.slane %v281, %v384
        %v386 = vmul.f32 %v368, %v385
        %v387 = vmul.f32 %v372, %v385
        %v388 = vmul.f32 %v376, %v385
        %v389 = vmul.f32 %v380, %v385
        %v390 = vadd.f32 %v362, %v386
        %v391 = vadd.f32 %v363, %v387
        %v392 = vadd.f32 %v364, %v388
        %v393 = vadd.f32 %v365, %v389
        %394 = vset.pattern.permute.xlu0 4
        %395 = vperm.xlu0 %394, %v277
        %v396 = vpop.permute.xlu0 %395
        %398 = vset.pattern.permute.xlu0 4
        %399 = vperm.xlu0 %398, %v278
        %v400 = vpop.permute.xlu0 %399
        %402 = vset.pattern.permute.xlu0 4
        %403 = vperm.xlu0 %402, %v279
        %v404 = vpop.permute.xlu0 %403
        %406 = vset.pattern.permute.xlu0 4
        %407 = vperm.xlu0 %406, %v280
        %v408 = vpop.permute.xlu0 %407
        %v410 = vlaneseq
        %v411 = vshrl.u32 %v410, 7
        %v412 = vsub.s32 4, %v411
        %v413 = vrot.slane %v281, %v412
        %v414 = vmul.f32 %v396, %v413
        %v415 = vmul.f32 %v400, %v413
        %v416 = vmul.f32 %v404, %v413
        %v417 = vmul.f32 %v408, %v413
        %v418 = vadd.f32 %v390, %v414
        %v419 = vadd.f32 %v391, %v415
        %v420 = vadd.f32 %v392, %v416
        %v421 = vadd.f32 %v393, %v417
        %422 = vset.pattern.permute.xlu0 5
        %423 = vperm.xlu0 %422, %v277
        %v424 = vpop.permute.xlu0 %423
        %426 = vset.pattern.permute.xlu0 5
        %427 = vperm.xlu0 %426, %v278
        %v428 = vpop.permute.xlu0 %427
        %430 = vset.pattern.permute.xlu0 5
        %431 = vperm.xlu0 %430, %v279
        %v432 = vpop.permute.xlu0 %431
        %434 = vset.pattern.permute.xlu0 5
        %435 = vperm.xlu0 %434, %v280
        %v436 = vpop.permute.xlu0 %435
        %v438 = vlaneseq
        %v439 = vshrl.u32 %v438, 7
        %v440 = vsub.s32 5, %v439
        %v441 = vrot.slane %v281, %v440
        %v442 = vmul.f32 %v424, %v441
        %v443 = vmul.f32 %v428, %v441
        %v444 = vmul.f32 %v432, %v441
        %v445 = vmul.f32 %v436, %v441
        %v446 = vadd.f32 %v418, %v442
        %v447 = vadd.f32 %v419, %v443
        %v448 = vadd.f32 %v420, %v444
        %v449 = vadd.f32 %v421, %v445
        %450 = vset.pattern.permute.xlu0 6
        %451 = vperm.xlu0 %450, %v277
        %v452 = vpop.permute.xlu0 %451
        %454 = vset.pattern.permute.xlu0 6
        %455 = vperm.xlu0 %454, %v278
        %v456 = vpop.permute.xlu0 %455
        %458 = vset.pattern.permute.xlu0 6
        %459 = vperm.xlu0 %458, %v279
        %v460 = vpop.permute.xlu0 %459
        %462 = vset.pattern.permute.xlu0 6
        %463 = vperm.xlu0 %462, %v280
        %v464 = vpop.permute.xlu0 %463
        %v466 = vlaneseq
        %v467 = vshrl.u32 %v466, 7
        %v468 = vsub.s32 6, %v467
        %v469 = vrot.slane %v281, %v468
        %v470 = vmul.f32 %v452, %v469
        %v471 = vmul.f32 %v456, %v469
        %v472 = vmul.f32 %v460, %v469
        %v473 = vmul.f32 %v464, %v469
        %v474 = vadd.f32 %v446, %v470
        %v475 = vadd.f32 %v447, %v471
        %v476 = vadd.f32 %v448, %v472
        %v477 = vadd.f32 %v449, %v473
        %478 = vset.pattern.permute.xlu0 7
        %479 = vperm.xlu0 %478, %v277
        %v480 = vpop.permute.xlu0 %479
        %482 = vset.pattern.permute.xlu0 7
        %483 = vperm.xlu0 %482, %v278
        %v484 = vpop.permute.xlu0 %483
        %486 = vset.pattern.permute.xlu0 7
        %487 = vperm.xlu0 %486, %v279
        %v488 = vpop.permute.xlu0 %487
        %490 = vset.pattern.permute.xlu0 7
        %491 = vperm.xlu0 %490, %v280
        %v492 = vpop.permute.xlu0 %491
        %v494 = vlaneseq
        %v495 = vshrl.u32 %v494, 7
        %v496 = vsub.s32 7, %v495
        %v497 = vrot.slane %v281, %v496
        %v498 = vmul.f32 %v480, %v497
        %v499 = vmul.f32 %v484, %v497
        %v500 = vmul.f32 %v488, %v497
        %v501 = vmul.f32 %v492, %v497
        %v502 = vadd.f32 %v474, %v498
        %v503 = vadd.f32 %v475, %v499
        %v504 = vadd.f32 %v476, %v500
        %v505 = vadd.f32 %v477, %v501
        %vm506 = vcmask 64512
        %507 = vst.msk [vmem:[%s232] sm:$0xff] %vm506, %v502
        %508 = vst.msk [vmem:[%s232 + $0x8] sm:$0xff] %vm506, %v503
        %509 = vst.msk [vmem:[%s232 + $0x10] sm:$0xff] %vm506, %v504
        %510 = vst.msk [vmem:[%s232 + $0x18] sm:$0xff] %vm506, %v505
        %s511 = sand.u32 %s113, 1
        %s512 = scalar_lea.sflag [#allocation4], %s511
        %s513 = sand.u32 %s113, 1
        %s514 = smul.addr %s513, 32
        %s515 = scalar_lea.vmem [#allocation8], %s514
        // Predicated region
        $region45: #{tpu_custom_call.1} parent=31 // pred_check
          %p516 = pneg %p123
        $region46: #{tpu_custom_call.1} parent=31 // pred_check_branch
          %518 = sbr.rel (%p516) target = $region48
        $region47: #{tpu_custom_call.1} parent=31 // pred_region
          %s519 = smul.u32 4, %s26
          %s521 = ssub.s32 512, 512
          %522 = vsyncadd %s512, %s521
          %s523 = smul.addr %s25, 8
          %s524 = sadd.s32 %s519, %s523
          %s525 = smul.addr %s524, 128
          %s526 = scalar_lea.hbm %s3, %s525
          %s527 = sshll.u32 %s515, 4
          %s528 = int_to_ptr.vmem [resolvable:$true] %s527
          %533 = dma.vmem_to_hbm [thread:$0]  %s528, 512, %s526, %s512, 128, 128, 8
        $region48: #{tpu_custom_call.1} parent=31 // pred_fallthru
          _
      $region32: #{tpu_custom_call.1} parent=5 // pred_fallthru
        _
      %p534 = scmp.le.s32.totalorder 2, %s16
      // Predicated region
      $region49: #{tpu_custom_call.1} parent=5 // pred_check
        %p535 = pneg %p534
      $region50: #{tpu_custom_call.1} parent=5 // pred_check_branch
        %537 = sbr.rel (%p535) target = $region52
      $region51: #{tpu_custom_call.1} parent=5 // pred_region
        %s538 = ssub.s32 %s16, 2
        // Predicated region
        $region53: #{tpu_custom_call.1} parent=51 // pred_check
          %p539 = pneg %p129
        $region54: #{tpu_custom_call.1} parent=51 // pred_check_branch
          %541 = sbr.rel (%p539) target = $region56
        $region55: #{tpu_custom_call.1} parent=51 // pred_region
          %s542 = sand.u32 %s114, 1
          %s543 = scalar_lea.sflag [#allocation4], %s542
          %s544 = sand.u32 %s114, 1
          %s545 = smul.addr %s544, 32
          %s546 = scalar_lea.vmem [#allocation8], %s545
          %547 = dma.done %s543, 512
        $region56: #{tpu_custom_call.1} parent=51 // pred_fallthru
          _
      $region52: #{tpu_custom_call.1} parent=5 // pred_fallthru
        _
    $region6: #{tpu_custom_call.1} parent=1 // loop_footer
      %s20 = sadd.s32 1, %s16
    $region7: #{tpu_custom_call.1} parent=1 // loop_footer_branch
      %15 = sbr.rel target = $region3
    $region8: #{tpu_custom_call.1} parent=1 // loop_exit
      _
    %548 = vsyncpa [#allocation3], 1
    %s549 = scalar_lea.sflag [#allocation3], 1
    %550 = vsyncpa %s549, 1
    %551 = vsyncpa [#allocation6], 1
    %552 = vsyncpa [#allocation4], 1
    %s553 = scalar_lea.sflag [#allocation4], 1
    %554 = vsyncpa %s553, 1

</llo_original>
